<compile_context>
chip_gen: v5e
topology: v5e:2x2
jax: 0.10.0
libtpu: 0.0.40
codegen_flags: <defaults>
</compile_context>

<pallas_src>
import math

import jax
import jax.numpy as jnp
from jax import lax
from jax.experimental import pallas as pl
from jax.experimental.pallas import tpu as pltpu

N_WAY = 5  # fixed by the module's forward()


# --------------------------------------------------------------------------- #
# Kernels
# --------------------------------------------------------------------------- #
def _make_fused_kernel(inv_temp, inv_groups, compute_dtype):
    """Small-problem fast path: single grid step, whole batch resident."""

    def kernel(sel_ref, q_ref, k_ref, v_ref, proto_ref, attn_ref):
        # Fold 1/temperature into q (cheaper than scaling the Lq x Lk scores).
        q32 = q_ref[...].astype(jnp.float32) * inv_temp            # (B, Lq, D)
        qc = q32.astype(compute_dtype)
        kc = k_ref[...].astype(compute_dtype)                      # (B, Lk, D)

        # scores = (q/T) @ k^T, contracting D against D (no explicit k.T).
        s = jnp.einsum("bqd,bkd->bqk", qc, kc,
                       preferred_element_type=jnp.float32)         # (B, Lq, Lk)
        attn_ref[...] = s.astype(attn_ref.dtype)

        # Way-grouped mean via q-side grouping (sel @ (q k^T) == (sel @ q) k^T),
        # accumulated in f32.
        qg = jnp.einsum("bwq,bqd->bwd", sel_ref[...], q32,
                        preferred_element_type=jnp.float32) * inv_groups
        avg = jnp.einsum("bwd,bkd->bwk", qg.astype(compute_dtype), kc,
                         preferred_element_type=jnp.float32)       # (B, W, Lk)

        m = jnp.max(avg, axis=-1, keepdims=True)
        e = jnp.exp(avg - m)
        p = e * pl.reciprocal(jnp.sum(e, axis=-1, keepdims=True), approx=False)
        # TODO(synk): dropout(p=0.1) is identity in eval mode; training-mode
        # stochastic dropout (pltpu.prng_*) intentionally not applied.
        proto = jnp.einsum("bwk,bkd->bwd", p.astype(compute_dtype),
                           v_ref[...].astype(compute_dtype),
                           preferred_element_type=jnp.float32)     # (B, W, Dv)
        proto_ref[...] = proto.astype(proto_ref.dtype)

    return kernel


def _make_tiled_kernel(inv_temp, inv_groups, compute_dtype):
    """grid = (B, Lq // block_q); K/V resident, q-group sums accumulated."""

    def kernel(sel_ref, q_ref, k_ref, v_ref, proto_ref, attn_ref, qg_ref):
        i = pl.program_id(1)

        @pl.when(i == 0)
        def _init():
            qg_ref[...] = jnp.zeros_like(qg_ref)

        q32 = q_ref[0].astype(jnp.float32) * inv_temp              # (TQ, D)
        qc = q32.astype(compute_dtype)
        kc = k_ref[0].astype(compute_dtype)                        # (Lk, D)

        s = lax.dot_general(qc, kc, (((1,), (1,)), ((), ())),
                            preferred_element_type=jnp.float32)    # (TQ, Lk)
        attn_ref[0] = s.astype(attn_ref.dtype)

        # Accumulate way-grouped sums of the scaled q rows into a tiny
        # (n_way, D) f32 scratch (replaces the old per-tile selector @ scores).
        # Row r of the tile belongs to way r % n_way; the wrapper enforces
        # block_q % n_way == 0 so local and global row indices agree mod n_way.
        qg_ref[...] += jnp.dot(sel_ref[...], q32,
                               preferred_element_type=jnp.float32)

        @pl.when(i == pl.num_programs(1) - 1)
        def _finalize():
            qg = qg_ref[...] * inv_groups                          # (W, D)
            avg = lax.dot_general(qg.astype(compute_dtype), kc,
                                  (((1,), (1,)), ((), ())),
                                  preferred_element_type=jnp.float32)  # (W, Lk)
            m = jnp.max(avg, axis=-1, keepdims=True)
            e = jnp.exp(avg - m)
            p = e * pl.reciprocal(jnp.sum(e, axis=-1, keepdims=True),
                                  approx=False)
            # TODO(synk): dropout(p=0.1) is identity in eval mode (see above).
            proto = jnp.dot(p.astype(compute_dtype),
                            v_ref[0].astype(compute_dtype),
                            preferred_element_type=jnp.float32)    # (W, Dv)
            proto_ref[0] = proto.astype(proto_ref.dtype)

    return kernel


# --------------------------------------------------------------------------- #
# VMEM budgeting / tile selection
# --------------------------------------------------------------------------- #
def _vmem_budget_bytes():
    cap = None
    try:
        info = pltpu.get_tpu_info()
        cap = getattr(info, "vmem_capacity_bytes", None)
    except Exception:
        cap = None
    if not cap or cap <= 0:
        cap = 64 * 1024 * 1024          # conservative v7x per-TC floor
    return int(cap * 0.75)              # headroom for compiler temps


def _tiled_footprint_bytes(block_q, lk, d, dv, n_way, in_isz, attn_isz):
    return int(
        2 * lk * d * in_isz             # K resident (double-buffered)
        + 2 * lk * dv * in_isz          # V resident (double-buffered)
        + 2 * block_q * d * in_isz      # q tile double buffer
        + 2 * block_q * lk * attn_isz   # attn tile double buffer
        + 2 * n_way * block_q * 4       # selector (double-buffered, tiny)
        + block_q * lk * 4              # f32 score temp
        + block_q * d * 4               # f32 scaled-q temp
        + n_way * d * 4)                # q-group accumulator


def _fused_footprint_bytes(b, lq, lk, d, dv, n_way, in_isz, attn_isz):
    return int(
        b * lq * d * in_isz + b * lk * (d + dv) * in_isz
        + b * n_way * lq * 4                        # selector
        + b * lq * lk * attn_isz                    # attn output
        + b * lq * lk * 4 + b * lq * d * 4          # f32 temporaries
        + 4 * b * n_way * (d + 2 * lk + dv) * 4)    # small f32 temps


def _choose_block_q(lq, lk, d, dv, n_way, in_isz, attn_isz, budget):
    # block_q must divide Lq and be a multiple of lcm(8, n_way) (sublane +
    # way alignment); pick the biggest candidate whose steady-state VMEM
    # footprint fits the budget (esp. relevant for v7x's 64 MiB VMEM).
    step = (8 * n_way) // math.gcd(8, n_way)
    cands = [c for c in range(step, lq + 1, step) if lq % c == 0]
    if not cands:
        return lq
    fitting = [c for c in cands
               if _tiled_footprint_bytes(c, lk, d, dv, n_way,
                                         in_isz, attn_isz) <= budget]
    return max(fitting) if fitting else min(cands)


# --------------------------------------------------------------------------- #
# Wrapper
# --------------------------------------------------------------------------- #
def scaled_dot_product_attention(q, k, v, temperature, *, block_q=None,
                                 compute_dtype=None, attn_dtype=None):
    """Pallas TPU forward pass. Returns (proto, attn)."""
    B, Lq, D = q.shape
    Bk, Lk, Dk = k.shape
    Bv, Lkv, Dv = v.shape
    assert B == Bk == Bv and D == Dk and Lk == Lkv
    n_way = N_WAY
    assert Lq % n_way == 0, "q.shape[1] must be divisible by n_way=5"
    n_groups = Lq // n_way

    out_dtype = q.dtype
    attn_out_dtype = (jnp.dtype(attn_dtype) if attn_dtype is not None
                      else jnp.dtype(out_dtype))
    compute_dtype = (jnp.dtype(compute_dtype) if compute_dtype is not None
                     else jnp.dtype(q.dtype))

    # Cast in the wrapper so the HBM->VMEM DMA already moves the narrow dtype
    # (bf16 MXU operands on v6e/v7x also halve q/k/v HBM traffic).
    if jnp.dtype(q.dtype) != compute_dtype:
        q = q.astype(compute_dtype)
        k = k.astype(compute_dtype)
        v = v.astype(compute_dtype)

    inv_temp = 1.0 / float(temperature)
    inv_groups = 1.0 / float(n_groups)

    in_isz = compute_dtype.itemsize
    attn_isz = attn_out_dtype.itemsize
    budget = _vmem_budget_bytes()

    out_shapes = (
        jax.ShapeDtypeStruct((B, n_way, Dv), out_dtype),     # proto
        jax.ShapeDtypeStruct((B, Lq, Lk), attn_out_dtype),   # attn (scaled scores)
    )

    cost = pl.CostEstimate(
        flops=int(2 * B * Lq * Lk * D              # scores matmul
                  + 2 * B * Lq * D * n_way         # q-group selector matmul
                  + 2 * B * n_way * D * Lk         # avg = qg @ k^T
                  + 2 * B * n_way * Lk * Dv),      # proto matmul
        transcendentals=int(B * n_way * Lk),       # exp in softmax
        bytes_accessed=int(in_isz * (q.size + k.size + v.size)
                           + attn_isz * B * Lq * Lk
                           + jnp.dtype(out_dtype).itemsize * B * n_way * Dv),
    )

    # ---------------- small-problem fused fast path ---------------- #
    fused_bytes = _fused_footprint_bytes(B, Lq, Lk, D, Dv, n_way, in_isz, attn_isz)
    if block_q is None and fused_bytes <= min(budget, 8 * 1024 * 1024):
        sel = (jnp.arange(Lq, dtype=jnp.int32)[None, :] % n_way
               == jnp.arange(n_way, dtype=jnp.int32)[:, None]).astype(jnp.float32)
        sel = jnp.broadcast_to(sel[None], (B, n_way, Lq))
        kernel = _make_fused_kernel(inv_temp, inv_groups, compute_dtype)
        grid_spec = pltpu.PrefetchScalarGridSpec(
            num_scalar_prefetch=0,
            grid=(1,),
            in_specs=[
                pl.BlockSpec((B, n_way, Lq), lambda i: (0, 0, 0)),   # selector
                pl.BlockSpec((B, Lq, D),     lambda i: (0, 0, 0)),   # q
                pl.BlockSpec((B, Lk, D),     lambda i: (0, 0, 0)),   # k
                pl.BlockSpec((B, Lk, Dv),    lambda i: (0, 0, 0)),   # v
            ],
            out_specs=[
                pl.BlockSpec((B, n_way, Dv), lambda i: (0, 0, 0)),   # proto
                pl.BlockSpec((B, Lq, Lk),    lambda i: (0, 0, 0)),   # attn
            ],
        )
        return pl.pallas_call(
            kernel,
            out_shape=out_shapes,
            grid_spec=grid_spec,
            compiler_params=pltpu.CompilerParams(
                dimension_semantics=("arbitrary",),
                vmem_limit_bytes=budget),
            cost_estimate=cost,
        )(sel, q, k, v)

    # ---------------- tiled path ---------------- #
    if block_q is None:
        block_q = _choose_block_q(Lq, Lk, D, Dv, n_way, in_isz, attn_isz, budget)
    assert Lq % block_q == 0
    assert block_q == Lq or (block_q % 8 == 0 and block_q % n_way == 0)
    num_q_tiles = Lq // block_q

    # Selector built once in the wrapper (exact int32 modulo) and passed as a
    # tiny resident input with a constant index_map (never re-DMA'd).
    sel = (jnp.arange(block_q, dtype=jnp.int32)[None, :] % n_way
           == jnp.arange(n_way, dtype=jnp.int32)[:, None]).astype(jnp.float32)

    kernel = _make_tiled_kernel(inv_temp, inv_groups, compute_dtype)

    grid_spec = pltpu.PrefetchScalarGridSpec(
        num_scalar_prefetch=0,
        grid=(B, num_q_tiles),
        in_specs=[
            pl.BlockSpec((n_way, block_q), lambda b, i: (0, 0)),      # selector
            pl.BlockSpec((1, block_q, D),  lambda b, i: (b, i, 0)),   # q tile
            pl.BlockSpec((1, Lk, D),       lambda b, i: (b, 0, 0)),   # K resident
            pl.BlockSpec((1, Lk, Dv),      lambda b, i: (b, 0, 0)),   # V resident
        ],
        out_specs=[
            pl.BlockSpec((1, n_way, Dv),   lambda b, i: (b, 0, 0)),   # proto (revisited)
            pl.BlockSpec((1, block_q, Lk), lambda b, i: (b, i, 0)),   # attn tile
        ],
        scratch_shapes=[pltpu.VMEM((n_way, D), jnp.float32)],         # q-group acc
    )

    return pl.pallas_call(
        kernel,
        out_shape=out_shapes,
        grid_spec=grid_spec,
        compiler_params=pltpu.CompilerParams(
            dimension_semantics=("parallel", "arbitrary"),
            vmem_limit_bytes=budget),
        cost_estimate=cost,
    )(sel, q, k, v)


# --------------------------------------------------------------------------- #
# Reference + demo
# --------------------------------------------------------------------------- #
def _reference(q, k, v, temperature, n_way=N_WAY):
    B, Lq, _ = q.shape
    Lk = k.shape[1]
    attn = jnp.einsum("bqd,bkd->bqk", q, k) / temperature
    attn_avg = attn.reshape(B, Lq // n_way, n_way, Lk).mean(axis=1)
    attn_avg = jax.nn.softmax(attn_avg, axis=-1)
    proto = jnp.einsum("bwk,bkd->bwd", attn_avg, v)
    return proto, attn


if __name__ == "__main__":
    key = jax.random.PRNGKey(0)
    kq, kk, kv = jax.random.split(key, 3)

    B = 2
    n_way, n_shot = 5, 16
    Lq = n_way * n_shot          # 80 (must be a multiple of 5)
    Lk = 16
    D = 32
    temperature = float(D) ** 0.5

    q = jax.random.normal(kq, (B, Lq, D), dtype=jnp.float32)
    k = jax.random.normal(kk, (B, Lk, D), dtype=jnp.float32)
    v = jax.random.normal(kv, (B, Lk, D), dtype=jnp.float32)

    proto_r, attn_r = _reference(q, k, v, temperature)

    # 1) small-problem fused fast path (single grid step), f32.
    proto, attn = scaled_dot_product_attention(q, k, v, temperature)
    jax.block_until_ready((proto, attn))
    assert jnp.allclose(attn, attn_r, atol=1e-4, rtol=1e-4)
    assert jnp.allclose(proto, proto_r, atol=1e-4, rtol=1e-4)

    # 2) tiled / accumulator path (block_q=40 -> 2 q-tiles per batch), f32.
    proto, attn = scaled_dot_product_attention(q, k, v, temperature, block_q=40)
    jax.block_until_ready((proto, attn))
    assert jnp.allclose(attn, attn_r, atol=1e-4, rtol=1e-4)
    assert jnp.allclose(proto, proto_r, atol=1e-4, rtol=1e-4)

    # 3) bf16 MXU operands (v6e/v7x path), fused fast path.
    proto, attn = scaled_dot_product_attention(q, k, v, temperature,
                                               compute_dtype=jnp.bfloat16)
    jax.block_until_ready((proto, attn))
    assert jnp.allclose(attn, attn_r, atol=5e-2, rtol=5e-2)
    assert jnp.allclose(proto, proto_r, atol=5e-2, rtol=5e-2)

    # 4) bf16 MXU operands, tiled path.
    proto, attn = scaled_dot_product_attention(q, k, v, temperature,
                                               block_q=40,
                                               compute_dtype=jnp.bfloat16)
    jax.block_until_ready((proto, attn))
    assert jnp.allclose(attn, attn_r, atol=5e-2, rtol=5e-2)
    assert jnp.allclose(proto, proto_r, atol=5e-2, rtol=5e-2)

    print("KERNEL_OK")
</pallas_src>

<mosaic_0001>
module attributes {stable_mosaic.version = 11 : i64} {
  func.func @kernel(%arg0: i32, %arg1: memref<2x5x80xf32, #tpu.memory_space<vmem>>, %arg2: memref<2x80x32xf32, #tpu.memory_space<vmem>>, %arg3: memref<2x16x32xf32, #tpu.memory_space<vmem>>, %arg4: memref<2x16x32xf32, #tpu.memory_space<vmem>>, %arg5: memref<2x5x32xf32, #tpu.memory_space<vmem>>, %arg6: memref<2x80x16xf32, #tpu.memory_space<vmem>>) attributes {dimension_semantics = [#tpu.dimension_semantics<arbitrary>], iteration_bounds = array<i64: 1>, scalar_prefetch = 0 : i64, scratch_operands = 0 : i64, tpu.core_type = #tpu.core_type<tc>, window_params = [{pipeline_mode = #tpu.pipeline_mode<synchronous>, transform_indices = @transform_0, window_bounds = array<i64: 2, 5, 80>}, {pipeline_mode = #tpu.pipeline_mode<synchronous>, transform_indices = @transform_1, window_bounds = array<i64: 2, 80, 32>}, {pipeline_mode = #tpu.pipeline_mode<synchronous>, transform_indices = @transform_2, window_bounds = array<i64: 2, 16, 32>}, {pipeline_mode = #tpu.pipeline_mode<synchronous>, transform_indices = @transform_3, window_bounds = array<i64: 2, 16, 32>}, {pipeline_mode = #tpu.pipeline_mode<synchronous>, transform_indices = @transform_4, window_bounds = array<i64: 2, 5, 32>}, {pipeline_mode = #tpu.pipeline_mode<synchronous>, transform_indices = @transform_5, window_bounds = array<i64: 2, 80, 16>}]} {
    %c0 = arith.constant 0 : index
    %c0_0 = arith.constant 0 : index
    %c0_1 = arith.constant 0 : index
    %0 = vector.load %arg2[%c0, %c0_0, %c0_1] : memref<2x80x32xf32, #tpu.memory_space<vmem>>, vector<2x80x32xf32>
    %cst = arith.constant 0.176776692 : f32
    %1 = vector.broadcast %cst : f32 to vector<2x80x32xf32>
    %2 = arith.mulf %0, %1 : vector<2x80x32xf32>
    %c0_2 = arith.constant 0 : index
    %c0_3 = arith.constant 0 : index
    %c0_4 = arith.constant 0 : index
    %3 = vector.load %arg3[%c0_2, %c0_3, %c0_4] : memref<2x16x32xf32, #tpu.memory_space<vmem>>, vector<2x16x32xf32>
    "tpu.trace_start"() <{level = 10 : i32, message = "bqd,bkd->bqk"}> : () -> ()
    %cst_5 = arith.constant dense<0.000000e+00> : vector<2x80x16xf32>
    %4 = tpu.matmul %2, %3, %cst_5 {dimension_numbers = #tpu.dot_dimension_numbers<[2], [2], [1], [1], [0, 0, 0, 1, 1, 1], [0], [0]>} : vector<2x80x32xf32>, vector<2x16x32xf32>, vector<2x80x16xf32> -> vector<2x80x16xf32>
    "tpu.trace_stop"() : () -> ()
    %c0_6 = arith.constant 0 : index
    %c0_7 = arith.constant 0 : index
    %c0_8 = arith.constant 0 : index
    %5 = vector.load %arg6[%c0_6, %c0_7, %c0_8] : memref<2x80x16xf32, #tpu.memory_space<vmem>>, vector<2x80x16xf32>
    tpu.vector_store %arg6[%c0_6, %c0_7, %c0_8], %4 {strides = array<i32>} : memref<2x80x16xf32, #tpu.memory_space<vmem>>, vector<2x80x16xf32>,
    %c0_9 = arith.constant 0 : index
    %c0_10 = arith.constant 0 : index
    %c0_11 = arith.constant 0 : index
    %6 = vector.load %arg1[%c0_9, %c0_10, %c0_11] : memref<2x5x80xf32, #tpu.memory_space<vmem>>, vector<2x5x80xf32>
    "tpu.trace_start"() <{level = 10 : i32, message = "bwq,bqd->bwd"}> : () -> ()
    %cst_12 = arith.constant dense<0.000000e+00> : vector<2x5x32xf32>
    %7 = tpu.matmul %6, %2, %cst_12 {dimension_numbers = #tpu.dot_dimension_numbers<[2], [1], [1], [2], [0, 0, 0, 1, 1, 2], [0], [0]>} : vector<2x5x80xf32>, vector<2x80x32xf32>, vector<2x5x32xf32> -> vector<2x5x32xf32>
    "tpu.trace_stop"() : () -> ()
    %cst_13 = arith.constant 6.250000e-02 : f32
    %8 = vector.broadcast %cst_13 : f32 to vector<2x5x32xf32>
    %9 = arith.mulf %7, %8 : vector<2x5x32xf32>
    "tpu.trace_start"() <{level = 10 : i32, message = "bwd,bkd->bwk"}> : () -> ()
    %cst_14 = arith.constant dense<0.000000e+00> : vector<2x5x16xf32>
    %10 = tpu.matmul %9, %3, %cst_14 {dimension_numbers = #tpu.dot_dimension_numbers<[2], [2], [1], [1], [0, 0, 0, 1, 1, 1], [0], [0]>} : vector<2x5x32xf32>, vector<2x16x32xf32>, vector<2x5x16xf32> -> vector<2x5x16xf32>
    "tpu.trace_stop"() : () -> ()
    %cst_15 = arith.constant dense<0xFF800000> : vector<2x5xf32>
    %11 = vector.multi_reduction <maximumf>, %10, %cst_15 [2] : vector<2x5x16xf32> to vector<2x5xf32>
    %12 = vector.shape_cast %11 : vector<2x5xf32> to vector<2x5x1xf32>
    %13 = vector.broadcast %12 : vector<2x5x1xf32> to vector<2x5x16xf32>
    %14 = arith.subf %10, %13 : vector<2x5x16xf32>
    %15 = math.exp %14 : vector<2x5x16xf32>
    %cst_16 = arith.constant dense<0.000000e+00> : vector<2x5xf32>
    %16 = vector.multi_reduction <add>, %15, %cst_16 [2] : vector<2x5x16xf32> to vector<2x5xf32>
    %17 = vector.shape_cast %16 : vector<2x5xf32> to vector<2x5x1xf32>
    %18 = tpu.reciprocal %17 : vector<2x5x1xf32> -> vector<2x5x1xf32>
    %19 = vector.broadcast %18 : vector<2x5x1xf32> to vector<2x5x16xf32>
    %20 = arith.mulf %15, %19 : vector<2x5x16xf32>
    %c0_17 = arith.constant 0 : index
    %c0_18 = arith.constant 0 : index
    %c0_19 = arith.constant 0 : index
    %21 = vector.load %arg4[%c0_17, %c0_18, %c0_19] : memref<2x16x32xf32, #tpu.memory_space<vmem>>, vector<2x16x32xf32>
    "tpu.trace_start"() <{level = 10 : i32, message = "bwk,bkd->bwd"}> : () -> ()
    %cst_20 = arith.constant dense<0.000000e+00> : vector<2x5x32xf32>
    %22 = tpu.matmul %20, %21, %cst_20 {dimension_numbers = #tpu.dot_dimension_numbers<[2], [1], [1], [2], [0, 0, 0, 1, 1, 2], [0], [0]>} : vector<2x5x16xf32>, vector<2x16x32xf32>, vector<2x5x32xf32> -> vector<2x5x32xf32>
    "tpu.trace_stop"() : () -> ()
    %c0_21 = arith.constant 0 : index
    %c0_22 = arith.constant 0 : index
    %c0_23 = arith.constant 0 : index
    %23 = vector.load %arg5[%c0_21, %c0_22, %c0_23] : memref<2x5x32xf32, #tpu.memory_space<vmem>>, vector<2x5x32xf32>
    tpu.vector_store %arg5[%c0_21, %c0_22, %c0_23], %22 {strides = array<i32>} : memref<2x5x32xf32, #tpu.memory_space<vmem>>, vector<2x5x32xf32>,
    return
  }
  func.func @transform_0(%arg0: i32) -> (i32, i32, i32) {
    %c0_i32 = arith.constant 0 : i32
    %c0_i32_0 = arith.constant 0 : i32
    %c0_i32_1 = arith.constant 0 : i32
    %c0_i32_2 = arith.constant 0 : i32
    return %c0_i32, %c0_i32_0, %c0_i32_1 : i32, i32, i32
  }
  func.func @transform_1(%arg0: i32) -> (i32, i32, i32) {
    %c0_i32 = arith.constant 0 : i32
    %c0_i32_0 = arith.constant 0 : i32
    %c0_i32_1 = arith.constant 0 : i32
    %c0_i32_2 = arith.constant 0 : i32
    return %c0_i32, %c0_i32_0, %c0_i32_1 : i32, i32, i32
  }
  func.func @transform_2(%arg0: i32) -> (i32, i32, i32) {
    %c0_i32 = arith.constant 0 : i32
    %c0_i32_0 = arith.constant 0 : i32
    %c0_i32_1 = arith.constant 0 : i32
    %c0_i32_2 = arith.constant 0 : i32
    return %c0_i32, %c0_i32_0, %c0_i32_1 : i32, i32, i32
  }
  func.func @transform_3(%arg0: i32) -> (i32, i32, i32) {
    %c0_i32 = arith.constant 0 : i32
    %c0_i32_0 = arith.constant 0 : i32
    %c0_i32_1 = arith.constant 0 : i32
    %c0_i32_2 = arith.constant 0 : i32
    return %c0_i32, %c0_i32_0, %c0_i32_1 : i32, i32, i32
  }
  func.func @transform_4(%arg0: i32) -> (i32, i32, i32) {
    %c0_i32 = arith.constant 0 : i32
    %c0_i32_0 = arith.constant 0 : i32
    %c0_i32_1 = arith.constant 0 : i32
    %c0_i32_2 = arith.constant 0 : i32
    return %c0_i32, %c0_i32_0, %c0_i32_1 : i32, i32, i32
  }
  func.func @transform_5(%arg0: i32) -> (i32, i32, i32) {
    %c0_i32 = arith.constant 0 : i32
    %c0_i32_0 = arith.constant 0 : i32
    %c0_i32_1 = arith.constant 0 : i32
    %c0_i32_2 = arith.constant 0 : i32
    return %c0_i32, %c0_i32_0, %c0_i32_1 : i32, i32, i32
  }
}

</mosaic_0001>

<llo_original>
// kernel: tpu_custom_call.1
$region0: #{tpu_custom_call.1}
  #allocation0 [shape = 'u32[]', space=smem, size = 0x4, offset = 0x4, fixed_abs, tag = 'smem constant byte address 0x4 - core index']
  #allocation1 [shape = 'u32[72,128]{1,0:T(1,128)}', space=vmem, size = 0x9000, scoped, tag = 'internal scratch']
  %s0 = inlined_call_operand.vmem [shape: f32[2,5,80], index: 0, kind: input, shape index: {}]
  %s1 = inlined_call_operand.vmem [shape: f32[2,80,32], index: 1, kind: input, shape index: {}]
  %s2 = inlined_call_operand.vmem [shape: f32[2,16,32], index: 2, kind: input, shape index: {}]
  %s3 = inlined_call_operand.vmem [shape: f32[2,16,32], index: 3, kind: input, shape index: {}]
  %s4 = inlined_call_operand.vmem [shape: f32[2,5,32], index: 4, kind: output, shape index: {0}]
  %s5 = inlined_call_operand.vmem [shape: f32[2,80,16], index: 5, kind: output, shape index: {1}]
  %6 = xla_tuple %s4, %s5
  %s7 = sld [smem:[#allocation0]]
  $region34: #{tpu_custom_call.1} parent=0
    _
  %s9 = ssub.s32 1, %s7
  %s10 = scalar_select 0, %s9, %s7
  // Predicated region
  $region2: #{tpu_custom_call.1} parent=0 // pred_check
    _
  $region3: #{tpu_custom_call.1} parent=0 // pred_check_branch
    %12 = sbr.rel (0) target = $region5
  $region4: #{tpu_custom_call.1} parent=0 // pred_region
    _
  $region5: #{tpu_custom_call.1} parent=0 // pred_fallthru
    _
  // Predicated region
  $region6: #{tpu_custom_call.1} parent=0 // pred_check
    _
  $region7: #{tpu_custom_call.1} parent=0 // pred_check_branch
    %14 = sbr.rel (0) target = $region9
  $region8: #{tpu_custom_call.1} parent=0 // pred_region
    _
  $region9: #{tpu_custom_call.1} parent=0 // pred_fallthru
    _
  // Predicated region
  $region10: #{tpu_custom_call.1} parent=0 // pred_check
    _
  $region11: #{tpu_custom_call.1} parent=0 // pred_check_branch
    %16 = sbr.rel (0) target = $region13
  $region12: #{tpu_custom_call.1} parent=0 // pred_region
    _
  $region13: #{tpu_custom_call.1} parent=0 // pred_fallthru
    _
  // Predicated region
  $region14: #{tpu_custom_call.1} parent=0 // pred_check
    _
  $region15: #{tpu_custom_call.1} parent=0 // pred_check_branch
    %18 = sbr.rel (0) target = $region17
  $region16: #{tpu_custom_call.1} parent=0 // pred_region
    _
  $region17: #{tpu_custom_call.1} parent=0 // pred_fallthru
    _
  %v19 = vld [vmem:[%s1] sm:$0xff]
  %v20 = vld [vmem:[%s1 + $0x8] sm:$0xff]
  %v21 = vld [vmem:[%s1 + $0x10] sm:$0xff]
  %v22 = vld [vmem:[%s1 + $0x18] sm:$0xff]
  %v23 = vld [vmem:[%s1 + $0x20] sm:$0xff]
  %v24 = vld [vmem:[%s1 + $0x28] sm:$0xff]
  %v25 = vld [vmem:[%s1 + $0x30] sm:$0xff]
  %v26 = vld [vmem:[%s1 + $0x38] sm:$0xff]
  %v27 = vld [vmem:[%s1 + $0x40] sm:$0xff]
  %v28 = vld [vmem:[%s1 + $0x48] sm:$0xff]
  %v29 = vld [vmem:[%s1 + $0x50] sm:$0xff]
  %v30 = vld [vmem:[%s1 + $0x58] sm:$0xff]
  %v31 = vld [vmem:[%s1 + $0x60] sm:$0xff]
  %v32 = vld [vmem:[%s1 + $0x68] sm:$0xff]
  %v33 = vld [vmem:[%s1 + $0x70] sm:$0xff]
  %v34 = vld [vmem:[%s1 + $0x78] sm:$0xff]
  %v35 = vld [vmem:[%s1 + $0x80] sm:$0xff]
  %v36 = vld [vmem:[%s1 + $0x88] sm:$0xff]
  %v37 = vld [vmem:[%s1 + $0x90] sm:$0xff]
  %v38 = vld [vmem:[%s1 + $0x98] sm:$0xff]
  %v39 = vmul.f32 %v19, 0.17677669
  %v40 = vmul.f32 %v20, 0.17677669
  %v41 = vmul.f32 %v21, 0.17677669
  %v42 = vmul.f32 %v22, 0.17677669
  %v43 = vmul.f32 %v23, 0.17677669
  %v44 = vmul.f32 %v24, 0.17677669
  %v45 = vmul.f32 %v25, 0.17677669
  %v46 = vmul.f32 %v26, 0.17677669
  %v47 = vmul.f32 %v27, 0.17677669
  %v48 = vmul.f32 %v28, 0.17677669
  %v49 = vmul.f32 %v29, 0.17677669
  %v50 = vmul.f32 %v30, 0.17677669
  %v51 = vmul.f32 %v31, 0.17677669
  %v52 = vmul.f32 %v32, 0.17677669
  %v53 = vmul.f32 %v33, 0.17677669
  %v54 = vmul.f32 %v34, 0.17677669
  %v55 = vmul.f32 %v35, 0.17677669
  %v56 = vmul.f32 %v36, 0.17677669
  %v57 = vmul.f32 %v37, 0.17677669
  %v58 = vmul.f32 %v38, 0.17677669
  %v59 = vld [vmem:[%s2] sm:$0xff]
  %v60 = vld [vmem:[%s2 + $0x8] sm:$0xff]
  %v61 = vld [vmem:[%s2 + $0x10] sm:$0xff]
  %v62 = vld [vmem:[%s2 + $0x18] sm:$0xff]
  %vm63 = vcmask 261120
  %v65 = vsel %vm63, %v39, 0
  %v68 = vsel %vm63, %v40, 0
  %v71 = vsel %vm63, %v41, 0
  %v74 = vsel %vm63, %v42, 0
  %v77 = vsel %vm63, %v43, 0
  %v80 = vsel %vm63, %v44, 0
  %v83 = vsel %vm63, %v45, 0
  %v86 = vsel %vm63, %v46, 0
  %v89 = vsel %vm63, %v47, 0
  %v92 = vsel %vm63, %v48, 0
  %v95 = vsel %vm63, %v59, 0
  %v98 = vsel %vm63, %v60, 0
  %100 = vmatpush.xpose.msra.mxu0 0.0
  %101 = vmatpush.xpose.msra.mxu0 0.0
  %102 = vmatpush.xpose.msra.mxu0 0.0
  %103 = vmatpush.xpose.msra.mxu0 0.0
  %104 = vmatpush.xpose.msra.mxu0 0.0
  %105 = vmatpush.xpose.msra.mxu0 0.0
  %106 = vmatpush.xpose.msra.mxu0 0.0
  %107 = vmatpush.xpose.msra.mxu0 0.0
  %108 = vmatpush.xpose.msra.mxu0 0.0
  %109 = vmatpush.xpose.msra.mxu0 0.0
  %110 = vmatpush.xpose.msra.mxu0 0.0
  %111 = vmatpush.xpose.msra.mxu0 0.0
  %112 = vmatpush.xpose.msra.mxu0 0.0
  %113 = vmatpush.xpose.msra.mxu0 0.0
  %114 = vmatpush.xpose.msra.mxu0 %v98
  %115 = vmatpush.xpose.msra.mxu0 %v95
  %116 = vmatmul.f32.gmra.mxu0 %v65
  %v117 = vpop.f32.mrf.mxu0
  %v118 = vadd.f32 0.0, %v117
  %119 = vmatmul.f32.gmra.mxu0 %v68
  %v120 = vpop.f32.mrf.mxu0
  %v121 = vadd.f32 0.0, %v120
  %122 = vmatmul.f32.gmra.mxu0 %v71
  %v123 = vpop.f32.mrf.mxu0
  %v124 = vadd.f32 0.0, %v123
  %125 = vmatmul.f32.gmra.mxu0 %v74
  %v126 = vpop.f32.mrf.mxu0
  %v127 = vadd.f32 0.0, %v126
  %128 = vmatmul.f32.gmra.mxu0 %v77
  %v129 = vpop.f32.mrf.mxu0
  %v130 = vadd.f32 0.0, %v129
  %131 = vmatmul.f32.gmra.mxu0 %v80
  %v132 = vpop.f32.mrf.mxu0
  %v133 = vadd.f32 0.0, %v132
  %134 = vmatmul.f32.gmra.mxu0 %v83
  %v135 = vpop.f32.mrf.mxu0
  %v136 = vadd.f32 0.0, %v135
  %137 = vmatmul.f32.gmra.mxu0 %v86
  %v138 = vpop.f32.mrf.mxu0
  %v139 = vadd.f32 0.0, %v138
  %140 = vmatmul.f32.gmra.mxu0 %v89
  %v141 = vpop.f32.mrf.mxu0
  %v142 = vadd.f32 0.0, %v141
  %143 = vmatmul.f32.gmra.mxu0 %v92
  %v144 = vpop.f32.mrf.mxu0
  %v145 = vadd.f32 0.0, %v144
  %146 = vdwg.mxu0
  %v148 = vsel %vm63, %v49, 0
  %v151 = vsel %vm63, %v50, 0
  %v154 = vsel %vm63, %v51, 0
  %v157 = vsel %vm63, %v52, 0
  %v160 = vsel %vm63, %v53, 0
  %v163 = vsel %vm63, %v54, 0
  %v166 = vsel %vm63, %v55, 0
  %v169 = vsel %vm63, %v56, 0
  %v172 = vsel %vm63, %v57, 0
  %v175 = vsel %vm63, %v58, 0
  %v178 = vsel %vm63, %v61, 0
  %v181 = vsel %vm63, %v62, 0
  %183 = vmatpush.xpose.msra.mxu0 0.0
  %184 = vmatpush.xpose.msra.mxu0 0.0
  %185 = vmatpush.xpose.msra.mxu0 0.0
  %186 = vmatpush.xpose.msra.mxu0 0.0
  %187 = vmatpush.xpose.msra.mxu0 0.0
  %188 = vmatpush.xpose.msra.mxu0 0.0
  %189 = vmatpush.xpose.msra.mxu0 0.0
  %190 = vmatpush.xpose.msra.mxu0 0.0
  %191 = vmatpush.xpose.msra.mxu0 0.0
  %192 = vmatpush.xpose.msra.mxu0 0.0
  %193 = vmatpush.xpose.msra.mxu0 0.0
  %194 = vmatpush.xpose.msra.mxu0 0.0
  %195 = vmatpush.xpose.msra.mxu0 0.0
  %196 = vmatpush.xpose.msra.mxu0 0.0
  %197 = vmatpush.xpose.msra.mxu0 %v181
  %198 = vmatpush.xpose.msra.mxu0 %v178
  %199 = vmatmul.f32.gmra.mxu0 %v148
  %v200 = vpop.f32.mrf.mxu0
  %v201 = vadd.f32 0.0, %v200
  %202 = vmatmul.f32.gmra.mxu0 %v151
  %v203 = vpop.f32.mrf.mxu0
  %v204 = vadd.f32 0.0, %v203
  %205 = vmatmul.f32.gmra.mxu0 %v154
  %v206 = vpop.f32.mrf.mxu0
  %v207 = vadd.f32 0.0, %v206
  %208 = vmatmul.f32.gmra.mxu0 %v157
  %v209 = vpop.f32.mrf.mxu0
  %v210 = vadd.f32 0.0, %v209
  %211 = vmatmul.f32.gmra.mxu0 %v160
  %v212 = vpop.f32.mrf.mxu0
  %v213 = vadd.f32 0.0, %v212
  %214 = vmatmul.f32.gmra.mxu0 %v163
  %v215 = vpop.f32.mrf.mxu0
  %v216 = vadd.f32 0.0, %v215
  %217 = vmatmul.f32.gmra.mxu0 %v166
  %v218 = vpop.f32.mrf.mxu0
  %v219 = vadd.f32 0.0, %v218
  %220 = vmatmul.f32.gmra.mxu0 %v169
  %v221 = vpop.f32.mrf.mxu0
  %v222 = vadd.f32 0.0, %v221
  %223 = vmatmul.f32.gmra.mxu0 %v172
  %v224 = vpop.f32.mrf.mxu0
  %v225 = vadd.f32 0.0, %v224
  %226 = vmatmul.f32.gmra.mxu0 %v175
  %v227 = vpop.f32.mrf.mxu0
  %v228 = vadd.f32 0.0, %v227
  %229 = vdwg.mxu0
  %vm230 = vcmask 130048
  %231 = vst.msk [vmem:[%s5] sm:$0xff] %vm230, %v118
  %232 = vst.msk [vmem:[%s5 + $0x8] sm:$0xff] %vm230, %v121
  %233 = vst.msk [vmem:[%s5 + $0x10] sm:$0xff] %vm230, %v124
  %234 = vst.msk [vmem:[%s5 + $0x18] sm:$0xff] %vm230, %v127
  %235 = vst.msk [vmem:[%s5 + $0x20] sm:$0xff] %vm230, %v130
  %236 = vst.msk [vmem:[%s5 + $0x28] sm:$0xff] %vm230, %v133
  %237 = vst.msk [vmem:[%s5 + $0x30] sm:$0xff] %vm230, %v136
  %238 = vst.msk [vmem:[%s5 + $0x38] sm:$0xff] %vm230, %v139
  %239 = vst.msk [vmem:[%s5 + $0x40] sm:$0xff] %vm230, %v142
  %240 = vst.msk [vmem:[%s5 + $0x48] sm:$0xff] %vm230, %v145
  %241 = vst.msk [vmem:[%s5 + $0x50] sm:$0xff] %vm230, %v201
  %242 = vst.msk [vmem:[%s5 + $0x58] sm:$0xff] %vm230, %v204
  %243 = vst.msk [vmem:[%s5 + $0x60] sm:$0xff] %vm230, %v207
  %244 = vst.msk [vmem:[%s5 + $0x68] sm:$0xff] %vm230, %v210
  %245 = vst.msk [vmem:[%s5 + $0x70] sm:$0xff] %vm230, %v213
  %246 = vst.msk [vmem:[%s5 + $0x78] sm:$0xff] %vm230, %v216
  %247 = vst.msk [vmem:[%s5 + $0x80] sm:$0xff] %vm230, %v219
  %248 = vst.msk [vmem:[%s5 + $0x88] sm:$0xff] %vm230, %v222
  %249 = vst.msk [vmem:[%s5 + $0x90] sm:$0xff] %vm230, %v225
  %250 = vst.msk [vmem:[%s5 + $0x98] sm:$0xff] %vm230, %v228
  %v251 = vld [vmem:[%s0] sm:$0x1f]
  %v252 = vld [vmem:[%s0 + $0x8] sm:$0x1f]
  %vm253 = vcmask 654336
  %v255 = vsel %vm253, %v251, 0
  %257 = vmatpush.msra.mxu0 0.0
  %258 = vmatpush.msra.mxu0 0.0
  %259 = vmatpush.msra.mxu0 0.0
  %260 = vmatpush.msra.mxu0 0.0
  %261 = vmatpush.msra.mxu0 0.0
  %262 = vmatpush.msra.mxu0 0.0
  %263 = vmatpush.msra.mxu0 %v48
  %264 = vmatpush.msra.mxu0 %v47
  %265 = vmatpush.msra.mxu0 %v46
  %266 = vmatpush.msra.mxu0 %v45
  %267 = vmatpush.msra.mxu0 %v44
  %268 = vmatpush.msra.mxu0 %v43
  %269 = vmatpush.msra.mxu0 %v42
  %270 = vmatpush.msra.mxu0 %v41
  %271 = vmatpush.msra.mxu0 %v40
  %272 = vmatpush.msra.mxu0 %v39
  %273 = vmatmul.f32.gmra.mxu0 %v255
  %v274 = vpop.f32.mrf.mxu0
  %v275 = vadd.f32 0.0, %v274
  %276 = vdwg.mxu0
  %v278 = vsel %vm253, %v252, 0
  %280 = vmatpush.msra.mxu0 0.0
  %281 = vmatpush.msra.mxu0 0.0
  %282 = vmatpush.msra.mxu0 0.0
  %283 = vmatpush.msra.mxu0 0.0
  %284 = vmatpush.msra.mxu0 0.0
  %285 = vmatpush.msra.mxu0 0.0
  %286 = vmatpush.msra.mxu0 %v58
  %287 = vmatpush.msra.mxu0 %v57
  %288 = vmatpush.msra.mxu0 %v56
  %289 = vmatpush.msra.mxu0 %v55
  %290 = vmatpush.msra.mxu0 %v54
  %291 = vmatpush.msra.mxu0 %v53
  %292 = vmatpush.msra.mxu0 %v52
  %293 = vmatpush.msra.mxu0 %v51
  %294 = vmatpush.msra.mxu0 %v50
  %295 = vmatpush.msra.mxu0 %v49
  %296 = vmatmul.f32.gmra.mxu0 %v278
  %v297 = vpop.f32.mrf.mxu0
  %v298 = vadd.f32 0.0, %v297
  %299 = vdwg.mxu0
  %v300 = vmul.f32 %v275, 0.0625
  %v301 = vmul.f32 %v298, 0.0625
  %v303 = vsel %vm63, %v300, 0
  %305 = vmatpush.xpose.msra.mxu0 0.0
  %306 = vmatpush.xpose.msra.mxu0 0.0
  %307 = vmatpush.xpose.msra.mxu0 0.0
  %308 = vmatpush.xpose.msra.mxu0 0.0
  %309 = vmatpush.xpose.msra.mxu0 0.0
  %310 = vmatpush.xpose.msra.mxu0 0.0
  %311 = vmatpush.xpose.msra.mxu0 0.0
  %312 = vmatpush.xpose.msra.mxu0 0.0
  %313 = vmatpush.xpose.msra.mxu0 0.0
  %314 = vmatpush.xpose.msra.mxu0 0.0
  %315 = vmatpush.xpose.msra.mxu0 0.0
  %316 = vmatpush.xpose.msra.mxu0 0.0
  %317 = vmatpush.xpose.msra.mxu0 0.0
  %318 = vmatpush.xpose.msra.mxu0 0.0
  %319 = vmatpush.xpose.msra.mxu0 %v98
  %320 = vmatpush.xpose.msra.mxu0 %v95
  %321 = vmatmul.f32.gmra.mxu0 %v303
  %v322 = vpop.f32.mrf.mxu0
  %v323 = vadd.f32 0.0, %v322
  %324 = vdwg.mxu0
  %v326 = vsel %vm63, %v301, 0
  %328 = vmatpush.xpose.msra.mxu0 0.0
  %329 = vmatpush.xpose.msra.mxu0 0.0
  %330 = vmatpush.xpose.msra.mxu0 0.0
  %331 = vmatpush.xpose.msra.mxu0 0.0
  %332 = vmatpush.xpose.msra.mxu0 0.0
  %333 = vmatpush.xpose.msra.mxu0 0.0
  %334 = vmatpush.xpose.msra.mxu0 0.0
  %335 = vmatpush.xpose.msra.mxu0 0.0
  %336 = vmatpush.xpose.msra.mxu0 0.0
  %337 = vmatpush.xpose.msra.mxu0 0.0
  %338 = vmatpush.xpose.msra.mxu0 0.0
  %339 = vmatpush.xpose.msra.mxu0 0.0
  %340 = vmatpush.xpose.msra.mxu0 0.0
  %341 = vmatpush.xpose.msra.mxu0 0.0
  %342 = vmatpush.xpose.msra.mxu0 %v181
  %343 = vmatpush.xpose.msra.mxu0 %v178
  %344 = vmatmul.f32.gmra.mxu0 %v326
  %v345 = vpop.f32.mrf.mxu0
  %v346 = vadd.f32 0.0, %v345
  %347 = vdwg.mxu0
  %vm348 = vcmask 126976
  %v349 = vsel %vm348, %v323, -inf
  %350 = vmax.xlane.f32.xlu0 %v349
  %v351 = vpop.xlane.xlu0 %350
  %v352 = vsel %vm348, %v346, -inf
  %353 = vmax.xlane.f32.xlu0 %v352
  %v354 = vpop.xlane.xlu0 %353
  %v355 = vsub.f32 %v323, %v351
  %v356 = vsub.f32 %v346, %v354
  %v357 = vmul.f32 %v355, 1.442695
  %v358 = vpow.pop %v357
  %v359 = vmul.f32 %v356, 1.442695
  %v360 = vpow.pop %v359
  %v361 = vsel %vm348, %v358, 0.0
  %362 = vadd.xlane.f32.xlu0 %v361
  %v363 = vpop.xlane.xlu0 %362
  %v364 = vsel %vm348, %v360, 0.0
  %365 = vadd.xlane.f32.xlu0 %v364
  %v366 = vpop.xlane.xlu0 %365
  %v367 = vrcp.pop %v363
  %v368 = vmul.f32 %v363, %v367
  %v369 = vsub.f32 1.0, %v368
  %v370 = vmul.f32 %v367, %v369
  %v371 = vadd.f32 %v367, %v370
  %vm372 = vweird.f32 %v363
  %vm373 = vweird.f32 %v367
  %vm374 = vmor %vm372, %vm373
  %v375 = vsel %vm374, %v367, %v371
  %v376 = vand.u32 2147483647, %v363
  %vm377 = vcmp.eq.f32.partialorder %v376, 8.507059e+37
  %v378 = vand.u32 %v363, 2147483648
  %v379 = vor.u32 1.1754944e-38, %v378
  %v380 = vsel %vm377, %v379, %v375
  %v381 = vrcp.pop %v366
  %v382 = vmul.f32 %v366, %v381
  %v383 = vsub.f32 1.0, %v382
  %v384 = vmul.f32 %v381, %v383
  %v385 = vadd.f32 %v381, %v384
  %vm386 = vweird.f32 %v366
  %vm387 = vweird.f32 %v381
  %vm388 = vmor %vm386, %vm387
  %v389 = vsel %vm388, %v381, %v385
  %v390 = vand.u32 2147483647, %v366
  %vm391 = vcmp.eq.f32.partialorder %v390, 8.507059e+37
  %v392 = vand.u32 %v366, 2147483648
  %v393 = vor.u32 1.1754944e-38, %v392
  %v394 = vsel %vm391, %v393, %v389
  %v395 = vmul.f32 %v358, %v380
  %v396 = vmul.f32 %v360, %v394
  %v397 = vld [vmem:[%s3] sm:$0xff]
  %v398 = vld [vmem:[%s3 + $0x8] sm:$0xff]
  %v399 = vld [vmem:[%s3 + $0x10] sm:$0xff]
  %v400 = vld [vmem:[%s3 + $0x18] sm:$0xff]
  %v402 = vsel %vm230, %v395, 0
  %404 = vmatpush.msra.mxu0 0.0
  %405 = vmatpush.msra.mxu0 0.0
  %406 = vmatpush.msra.mxu0 0.0
  %407 = vmatpush.msra.mxu0 0.0
  %408 = vmatpush.msra.mxu0 0.0
  %409 = vmatpush.msra.mxu0 0.0
  %410 = vmatpush.msra.mxu0 0.0
  %411 = vmatpush.msra.mxu0 0.0
  %412 = vmatpush.msra.mxu0 0.0
  %413 = vmatpush.msra.mxu0 0.0
  %414 = vmatpush.msra.mxu0 0.0
  %415 = vmatpush.msra.mxu0 0.0
  %416 = vmatpush.msra.mxu0 0.0
  %417 = vmatpush.msra.mxu0 0.0
  %418 = vmatpush.msra.mxu0 %v398
  %419 = vmatpush.msra.mxu0 %v397
  %420 = vmatmul.f32.gmra.mxu0 %v402
  %v421 = vpop.f32.mrf.mxu0
  %v422 = vadd.f32 0.0, %v421
  %423 = vdwg.mxu0
  %v425 = vsel %vm230, %v396, 0
  %427 = vmatpush.msra.mxu0 0.0
  %428 = vmatpush.msra.mxu0 0.0
  %429 = vmatpush.msra.mxu0 0.0
  %430 = vmatpush.msra.mxu0 0.0
  %431 = vmatpush.msra.mxu0 0.0
  %432 = vmatpush.msra.mxu0 0.0
  %433 = vmatpush.msra.mxu0 0.0
  %434 = vmatpush.msra.mxu0 0.0
  %435 = vmatpush.msra.mxu0 0.0
  %436 = vmatpush.msra.mxu0 0.0
  %437 = vmatpush.msra.mxu0 0.0
  %438 = vmatpush.msra.mxu0 0.0
  %439 = vmatpush.msra.mxu0 0.0
  %440 = vmatpush.msra.mxu0 0.0
  %441 = vmatpush.msra.mxu0 %v400
  %442 = vmatpush.msra.mxu0 %v399
  %443 = vmatmul.f32.gmra.mxu0 %v425
  %v444 = vpop.f32.mrf.mxu0
  %v445 = vadd.f32 0.0, %v444
  %446 = vdwg.mxu0
  %vm447 = vcmask 258048
  %448 = vst.msk [vmem:[%s4] sm:$0x1f] %vm447, %v422
  %449 = vst.msk [vmem:[%s4 + $0x8] sm:$0x1f] %vm447, %v445
  // Predicated region
  $region18: #{tpu_custom_call.1} parent=0 // pred_check
    _
  $region19: #{tpu_custom_call.1} parent=0 // pred_check_branch
    %451 = sbr.rel (0) target = $region21
  $region20: #{tpu_custom_call.1} parent=0 // pred_region
    _
  $region21: #{tpu_custom_call.1} parent=0 // pred_fallthru
    _
  // Predicated region
  $region22: #{tpu_custom_call.1} parent=0 // pred_check
    _
  $region23: #{tpu_custom_call.1} parent=0 // pred_check_branch
    %453 = sbr.rel (0) target = $region25
  $region24: #{tpu_custom_call.1} parent=0 // pred_region
    _
  $region25: #{tpu_custom_call.1} parent=0 // pred_fallthru
    _
  // Predicated region
  $region26: #{tpu_custom_call.1} parent=0 // pred_check
    _
  $region27: #{tpu_custom_call.1} parent=0 // pred_check_branch
    %455 = sbr.rel (0) target = $region29
  $region28: #{tpu_custom_call.1} parent=0 // pred_region
    _
  $region29: #{tpu_custom_call.1} parent=0 // pred_fallthru
    _
  // Predicated region
  $region30: #{tpu_custom_call.1} parent=0 // pred_check
    _
  $region31: #{tpu_custom_call.1} parent=0 // pred_check_branch
    %457 = sbr.rel (0) target = $region33
  $region32: #{tpu_custom_call.1} parent=0 // pred_region
    _
  $region33: #{tpu_custom_call.1} parent=0 // pred_fallthru
    _

</llo_original>
